<compile_context>
chip_gen: v7x
topology: tpu7x:2x2x1
jax: 0.10.0
libtpu: 0.0.40
codegen_flags: <defaults>
</compile_context>

<pallas_src>
import math
import functools

import jax
import jax.numpy as jnp
from jax.experimental import pallas as pl
from jax.experimental.pallas import tpu as pltpu


def _round_up(v, m):
    return (v + m - 1) // m * m


def _vmem_budget_bytes():
    """Generation-aware VMEM budget (v5e/v6e: 128 MiB, v7x: 64 MiB per TC)."""
    cap = None
    try:
        info = pltpu.get_tpu_info()
        cap = getattr(info, "vmem_capacity_bytes", None)
    except Exception:
        cap = None
    if not cap:
        cap = 64 * 1024 * 1024              # conservative fallback: v7x per-TC VMEM
    budget = int(cap * 0.70)                # working-set budget for tile picking
    limit = max(int(cap * 0.85), 32 * 1024 * 1024)   # scoped limit handed to Mosaic
    return budget, limit


def _linear_embed_kernel(x_ref, w_ref, b_ref, o_ref, *, scale):
    # x_ref: (TM, K)   w_ref: (K, TN) [resident]   b_ref: (1, TN)   o_ref: (TM, TN)
    acc = jnp.dot(x_ref[...], w_ref[...], preferred_element_type=jnp.float32)
    acc = (acc + b_ref[...].astype(jnp.float32)) * scale
    o_ref[...] = acc.astype(o_ref.dtype)


def _tm_candidates(m, granule):
    cap = _round_up(max(m, granule), granule)
    base = (1024, 512, 256, 128, 64, 32, 16, 8)
    cands = {min(c, cap) for c in base if c % granule == 0}
    cands.add(granule)
    cands = sorted(cands, reverse=True)
    # Keep >= 2 row tiles once there is enough work (v7x megacore); on
    # v5e/v6e this costs at most one extra ~0.35us grid step.
    if m >= 512:
        cands = [t for t in cands if t < m] or [granule]
    return cands


def _pick_tiles(m, k, d_model, itemsize, budget):
    """Returns (tm, tn, n_total, grid_n)."""
    granule = {4: 8, 2: 16, 1: 32}.get(itemsize, 8)   # dtype-aware sublane packing
    cands = _tm_candidates(m, granule)

    def fits(tm, tn, w_buf_bytes):
        x_bytes = 2 * tm * k * itemsize        # double-buffered streamed x tile
        o_bytes = 2 * tm * tn * itemsize       # double-buffered streamed out tile
        b_bytes = 2 * tn * itemsize            # bias row (double-buffered)
        acc_bytes = tm * tn * 4                # f32 matmul intermediate
        return w_buf_bytes + b_bytes + x_bytes + o_bytes + acc_bytes <= budget

    # ---- Resident-weight path (grid_n == 1) ----
    # Lane padding of d_model only when it is large and the pad fraction is
    # small; otherwise write d_model columns directly (full-dim block is legal
    # and avoids multiplying output writeback for small d_model).
    if d_model < 128 or d_model % 128 == 0:
        n_res = d_model
    else:
        n128 = _round_up(d_model, 128)
        n_res = n128 if (n128 - d_model) * 8 <= d_model else d_model

    w_buf = 2 * k * n_res * itemsize           # 2x: inputs are double-buffered
    for tm in cands:
        if fits(tm, n_res, w_buf):
            return tm, n_res, n_res, 1

    # ---- N-tiled fallback (large d_model * inp_size) ----
    for tn in (512, 256, 128):
        w_buf = 2 * k * tn * itemsize
        for tm in cands:
            if fits(tm, tn, w_buf):
                n_total = _round_up(d_model, tn)
                return tm, tn, n_total, n_total // tn

    # Last resort: minimal tiles.
    tn = 128
    n_total = _round_up(d_model, tn)
    return granule, tn, n_total, n_total // tn


def linear_embedding(x, weight, bias, d_model):
    """x: (..., inp_size); weight: (d_model, inp_size) torch layout; bias: (d_model,)."""
    inp_size = x.shape[-1]
    lead = x.shape[:-1]
    m = 1
    for v in lead:
        m *= int(v)
    m = max(m, 1)

    dtype = x.dtype
    itemsize = jnp.dtype(dtype).itemsize
    scale = math.sqrt(d_model)

    budget, vmem_limit = _vmem_budget_bytes()
    tm, tn, n_total, grid_n = _pick_tiles(m, inp_size, d_model, itemsize, budget)
    grid_m = pl.cdiv(m, tm)

    # No M padding / row slice: Pallas masks the ragged last row block.
    x2d = x.reshape(m, inp_size)

    # One-time (K, N) weight layout -> standard contraction, no per-step
    # relayout of the resident weight.  W traffic is tiny vs. streamed x/out.
    w_kn = weight.astype(dtype).T
    b_row = bias.astype(dtype).reshape(1, d_model)
    if n_total != d_model:
        w_kn = jnp.pad(w_kn, ((0, 0), (0, n_total - d_model)))
        b_row = jnp.pad(b_row, ((0, 0), (0, n_total - d_model)))

    cost = pl.CostEstimate(
        flops=2 * m * inp_size * n_total,
        transcendentals=0,
        bytes_accessed=(grid_n * m * inp_size       # x re-read once per N tile
                        + inp_size * n_total        # weight (read once total)
                        + n_total                   # bias
                        + m * n_total) * itemsize,  # output writeback
    )

    out2d = pl.pallas_call(
        functools.partial(_linear_embed_kernel, scale=scale),
        out_shape=jax.ShapeDtypeStruct((m, n_total), dtype),
        grid_spec=pltpu.PrefetchScalarGridSpec(
            num_scalar_prefetch=0,
            grid=(grid_n, grid_m),                  # N outer: each W tile DMA'd once
            in_specs=[
                pl.BlockSpec((tm, inp_size), lambda j, i: (i, 0)),   # x streams over M
                pl.BlockSpec((inp_size, tn), lambda j, i: (0, j)),   # W resident per N tile
                pl.BlockSpec((1, tn), lambda j, i: (0, j)),          # bias resident per N tile
            ],
            out_specs=pl.BlockSpec((tm, tn), lambda j, i: (i, j)),
        ),
        compiler_params=pltpu.CompilerParams(
            dimension_semantics=("parallel", "parallel"),   # megacore-friendly
            vmem_limit_bytes=vmem_limit,
        ),
        cost_estimate=cost,
    )(x2d, w_kn, b_row)

    if n_total != d_model:
        out2d = out2d[:, :d_model]
    return out2d.reshape(*lead, d_model)


if __name__ == "__main__":
    # Small shapes consistent with the module: x (batch, seq, inp_size)
    batch, seq, inp_size, d_model = 2, 8, 16, 32

    key = jax.random.PRNGKey(0)
    kx, kw, kb = jax.random.split(key, 3)

    x = jax.random.normal(kx, (batch, seq, inp_size), dtype=jnp.float32)

    # Deterministic params mimicking nn.Linear default U[-1/sqrt(K), 1/sqrt(K)]
    bound = 1.0 / math.sqrt(inp_size)
    weight = jax.random.uniform(kw, (d_model, inp_size), jnp.float32, -bound, bound)
    bias = jax.random.uniform(kb, (d_model,), jnp.float32, -bound, bound)

    out = linear_embedding(x, weight, bias, d_model)
    out = jax.block_until_ready(out)

    # Reference: nn.Linear followed by * sqrt(d_model)
    ref = (x @ weight.T + bias) * math.sqrt(d_model)
    assert out.shape == (batch, seq, d_model)
    assert jnp.allclose(out, ref, atol=1e-5, rtol=1e-5)

    print("KERNEL_OK")
</pallas_src>

<mosaic_0001>
module attributes {stable_mosaic.version = 11 : i64} {
  func.func @_linear_embed_kernel(%arg0: i32, %arg1: i32, %arg2: memref<16x16xf32, #tpu.memory_space<vmem>>, %arg3: memref<16x32xf32, #tpu.memory_space<vmem>>, %arg4: memref<1x32xf32, #tpu.memory_space<vmem>>, %arg5: memref<16x32xf32, #tpu.memory_space<vmem>>) attributes {dimension_semantics = [#tpu.dimension_semantics<parallel>, #tpu.dimension_semantics<parallel>], iteration_bounds = array<i64: 1, 1>, scalar_prefetch = 0 : i64, scratch_operands = 0 : i64, tpu.core_type = #tpu.core_type<tc>, window_params = [{transform_indices = @transform_0, window_bounds = array<i64: 16, 16>}, {transform_indices = @transform_1, window_bounds = array<i64: 16, 32>}, {transform_indices = @transform_2, window_bounds = array<i64: 1, 32>}, {transform_indices = @transform_3, window_bounds = array<i64: 16, 32>}]} {
    %c0 = arith.constant 0 : index
    %c0_0 = arith.constant 0 : index
    %0 = vector.load %arg2[%c0, %c0_0] : memref<16x16xf32, #tpu.memory_space<vmem>>, vector<16x16xf32>
    %c0_1 = arith.constant 0 : index
    %c0_2 = arith.constant 0 : index
    %1 = vector.load %arg3[%c0_1, %c0_2] : memref<16x32xf32, #tpu.memory_space<vmem>>, vector<16x32xf32>
    %cst = arith.constant dense<0.000000e+00> : vector<16x32xf32>
    %2 = tpu.matmul %0, %1, %cst {dimension_numbers = #tpu.dot_dimension_numbers<[1], [0], [0], [1], [0, 0, 1, 1], [], []>} : vector<16x16xf32>, vector<16x32xf32>, vector<16x32xf32> -> vector<16x32xf32>
    %c0_3 = arith.constant 0 : index
    %c0_4 = arith.constant 0 : index
    %3 = vector.load %arg4[%c0_3, %c0_4] : memref<1x32xf32, #tpu.memory_space<vmem>>, vector<1x32xf32>
    %4 = vector.broadcast %3 : vector<1x32xf32> to vector<16x32xf32>
    %5 = arith.addf %2, %4 : vector<16x32xf32>
    %cst_5 = arith.constant 5.65685415 : f32
    %6 = vector.broadcast %cst_5 : f32 to vector<16x32xf32>
    %7 = arith.mulf %5, %6 : vector<16x32xf32>
    %c0_6 = arith.constant 0 : index
    %c0_7 = arith.constant 0 : index
    %8 = vector.load %arg5[%c0_6, %c0_7] : memref<16x32xf32, #tpu.memory_space<vmem>>, vector<16x32xf32>
    tpu.vector_store %arg5[%c0_6, %c0_7], %7 {strides = array<i32>} : memref<16x32xf32, #tpu.memory_space<vmem>>, vector<16x32xf32>,
    return
  }
  func.func @transform_0(%arg0: i32, %arg1: i32) -> (i32, i32) {
    %c0_i32 = arith.constant 0 : i32
    %c0_i32_0 = arith.constant 0 : i32
    return %arg1, %c0_i32 : i32, i32
  }
  func.func @transform_1(%arg0: i32, %arg1: i32) -> (i32, i32) {
    %c0_i32 = arith.constant 0 : i32
    %c0_i32_0 = arith.constant 0 : i32
    return %c0_i32, %arg0 : i32, i32
  }
  func.func @transform_2(%arg0: i32, %arg1: i32) -> (i32, i32) {
    %c0_i32 = arith.constant 0 : i32
    %c0_i32_0 = arith.constant 0 : i32
    return %c0_i32, %arg0 : i32, i32
  }
  func.func @transform_3(%arg0: i32, %arg1: i32) -> (i32, i32) {
    %c0_i32 = arith.constant 0 : i32
    return %arg1, %arg0 : i32, i32
  }
}

</mosaic_0001>

<llo_original>
// kernel: tpu_custom_call.1
$region0: #{tpu_custom_call.1}
  #allocation0 [shape = 'u32[]', space=smem, size = 0x4, offset = 0x4, fixed_abs, tag = 'smem constant byte address 0x4 - core index']
  #allocation1 [shape = 'u32[144,128]{1,0:T(1,128)}', space=vmem, size = 0x12000, scoped, tag = 'internal scratch']
  %s0 = inlined_call_operand.hbm [shape: f32[16,16], index: 0, kind: input, shape index: {}]
  %s1 = inlined_call_operand.hbm [shape: f32[16,32], index: 1, kind: input, shape index: {}]
  %s2 = inlined_call_operand.vmem [shape: f32[1,32], index: 2, kind: input, shape index: {}]
  %s3 = inlined_call_operand.hbm [shape: f32[16,32], index: 3, kind: output, shape index: {}]
  %s4 = sld [smem:[#allocation0]]
  $region30: #{tpu_custom_call.1} parent=0
    _
  %s6 = ssub.s32 1, %s4
  %s7 = scalar_select 0, %s6, %s4
  $region1: #{tpu_custom_call.1} parent=0
    #allocation2 [shape = 'u8[8192]{0}', space=vmem, size = 0x2000, scoped, tag = 'input window, operand 0, single buffered']
    #allocation3 [shape = 's32[1]{0}', space=sflag, size = 0x4, scoped, tag = 'scoped memory for tpu_custom_call.1']
    #allocation4 [shape = 's32[1]{0}', space=sflag, size = 0x4, scoped, tag = 'scoped memory for tpu_custom_call.1']
    #allocation5 [shape = 'u8[8192]{0}', space=vmem, size = 0x2000, scoped, tag = 'input window, operand 1, single buffered']
    #allocation6 [shape = 's32[1]{0}', space=sflag, size = 0x4, scoped, tag = 'scoped memory for tpu_custom_call.1']
    #allocation7 [shape = 'u8[8192]{0}', space=vmem, size = 0x2000, scoped, tag = 'output window, operand 0, single buffered']
    %8 = vsyncpa [#allocation3], 0
    %9 = vsyncpa [#allocation6], 0
    %10 = vsyncpa [#allocation4], 0
    // Predicated region
    $region2: #{tpu_custom_call.1} parent=1 // pred_check
      _
    $region3: #{tpu_custom_call.1} parent=1 // pred_check_branch
      %12 = sbr.rel (0) target = $region5
    $region4: #{tpu_custom_call.1} parent=1 // pred_region
      %s14 = ssub.s32 256, 256
      %15 = vsyncadd [#allocation3], %s14
      %s16 = sshll.u32 [#allocation2], 4
      %s17 = int_to_ptr.vmem [resolvable:$true] %s16
      %22 = dma.hbm_to_vmem [thread:$0]  %s0, 256, %s17, [#allocation3], 128, 128, 8
    $region5: #{tpu_custom_call.1} parent=1 // pred_fallthru
      _
    // Predicated region
    $region6: #{tpu_custom_call.1} parent=1 // pred_check
      _
    $region7: #{tpu_custom_call.1} parent=1 // pred_check_branch
      %24 = sbr.rel (0) target = $region9
    $region8: #{tpu_custom_call.1} parent=1 // pred_region
      %s26 = ssub.s32 256, 256
      %27 = vsyncadd [#allocation6], %s26
      %s28 = sshll.u32 [#allocation5], 4
      %s29 = int_to_ptr.vmem [resolvable:$true] %s28
      %34 = dma.hbm_to_vmem [thread:$0]  %s1, 256, %s29, [#allocation6], 128, 128, 8
    $region9: #{tpu_custom_call.1} parent=1 // pred_fallthru
      _
    // Predicated region
    $region10: #{tpu_custom_call.1} parent=1 // pred_check
      _
    $region11: #{tpu_custom_call.1} parent=1 // pred_check_branch
      %36 = sbr.rel (0) target = $region13
    $region12: #{tpu_custom_call.1} parent=1 // pred_region
      _
    $region13: #{tpu_custom_call.1} parent=1 // pred_fallthru
      _
    // Predicated region
    $region14: #{tpu_custom_call.1} parent=1 // pred_check
      _
    $region15: #{tpu_custom_call.1} parent=1 // pred_check_branch
      %38 = sbr.rel (0) target = $region17
    $region16: #{tpu_custom_call.1} parent=1 // pred_region
      %39 = dma.done [#allocation3], 256
    $region17: #{tpu_custom_call.1} parent=1 // pred_fallthru
      _
    // Predicated region
    $region18: #{tpu_custom_call.1} parent=1 // pred_check
      _
    $region19: #{tpu_custom_call.1} parent=1 // pred_check_branch
      %41 = sbr.rel (0) target = $region21
    $region20: #{tpu_custom_call.1} parent=1 // pred_region
      %42 = dma.done [#allocation6], 256
    $region21: #{tpu_custom_call.1} parent=1 // pred_fallthru
      _
    %v43 = vld [vmem:[#allocation2] sm:$0xff]
    %v44 = vld [vmem:[#allocation2 + $0x8] sm:$0xff]
    %v45 = vld [vmem:[#allocation5] sm:$0xff]
    %v46 = vld [vmem:[#allocation5 + $0x8] sm:$0xff]
    %v47 = vld [vmem:[%s2] sm:$0x1]
    %v49 = vlaneseq
    %v50 = vshrl.u32 %v49, 7
    %v51 = vsub.s32 0, %v50
    %v52 = vrot.slane %v47, %v51
    %vm54 = vcmask 130048
    %v56 = vsel %vm54, %v43, 0
    %v59 = vsel %vm54, %v44, 0
    %61 = vmatprep.subr.mxu0 0.0
    %62 = vmatpush1.msra.mxu0 %v45
    %63 = vmatprep.subr.mxu0 0.0
    %64 = vmatpush1.msra.mxu0 %v46
    %65 = vmatprep.subr.mxu0 0.0
    %66 = vmatpush1.msra.mxu0 0.0
    %67 = vmatprep.subr.mxu0 0.0
    %68 = vmatpush1.msra.mxu0 0.0
    %69 = vmatprep.subr.mxu0 0.0
    %70 = vmatpush1.msra.mxu0 0.0
    %71 = vmatprep.subr.mxu0 0.0
    %72 = vmatpush1.msra.mxu0 0.0
    %73 = vmatprep.subr.mxu0 0.0
    %74 = vmatpush1.msra.mxu0 0.0
    %75 = vmatprep.subr.mxu0 0.0
    %76 = vmatpush1.msra.mxu0 0.0
    %77 = vmatprep.subr.mxu0 0.0
    %78 = vmatpush1.msra.mxu0 0.0
    %79 = vmatprep.subr.mxu0 0.0
    %80 = vmatpush1.msra.mxu0 0.0
    %81 = vmatprep.subr.mxu0 0.0
    %82 = vmatpush1.msra.mxu0 0.0
    %83 = vmatprep.subr.mxu0 0.0
    %84 = vmatpush1.msra.mxu0 0.0
    %85 = vmatprep.subr.mxu0 0.0
    %86 = vmatpush1.msra.mxu0 0.0
    %87 = vmatprep.subr.mxu0 0.0
    %88 = vmatpush1.msra.mxu0 0.0
    %89 = vmatprep.subr.mxu0 0.0
    %90 = vmatpush1.msra.mxu0 0.0
    %91 = vmatprep.subr.mxu0 0.0
    %92 = vmatpush1.msra.mxu0 0.0
    %93 = vmatprep.subr.mxu0 0.0
    %94 = vmatpush1.msra.mxu0 0.0
    %95 = vmatprep.subr.mxu0 0.0
    %96 = vmatpush1.msra.mxu0 0.0
    %97 = vmatprep.subr.mxu0 0.0
    %98 = vmatpush1.msra.mxu0 0.0
    %99 = vmatprep.subr.mxu0 0.0
    %100 = vmatpush1.msra.mxu0 0.0
    %101 = vmatprep.subr.mxu0 0.0
    %102 = vmatpush1.msra.mxu0 0.0
    %103 = vmatprep.subr.mxu0 0.0
    %104 = vmatpush1.msra.mxu0 0.0
    %105 = vmatprep.subr.mxu0 0.0
    %106 = vmatpush1.msra.mxu0 0.0
    %107 = vmatprep.subr.mxu0 0.0
    %108 = vmatpush1.msra.mxu0 0.0
    %109 = vmatprep.subr.mxu0 0.0
    %110 = vmatpush1.msra.mxu0 0.0
    %111 = vmatprep.subr.mxu0 0.0
    %112 = vmatpush1.msra.mxu0 0.0
    %113 = vmatprep.subr.mxu0 0.0
    %114 = vmatpush1.msra.mxu0 0.0
    %115 = vmatprep.subr.mxu0 0.0
    %116 = vmatpush1.msra.mxu0 0.0
    %117 = vmatprep.subr.mxu0 0.0
    %118 = vmatpush1.msra.mxu0 0.0
    %119 = vmatprep.subr.mxu0 0.0
    %120 = vmatpush1.msra.mxu0 0.0
    %121 = vmatprep.subr.mxu0 0.0
    %122 = vmatpush1.msra.mxu0 0.0
    %123 = vmatprep.subr.mxu0 0.0
    %124 = vmatpush1.msra.mxu0 0.0
    %125 = vmatprep.mubr.f32.mxu0 0.0
    %126 = vmatmul.mubr.f32.gmra.mrb[0].mxu0 %v56
    %v127 = vpop.f32.mrb[0].mxu0
    %v128 = vadd.f32 %v52, %v127
    %v129 = vpop.f32.mrb[0].mxu0
    %130 = vmatprep.mubr.f32.mxu0 0.0
    %131 = vmatmul.mubr.f32.gmra.mrb[0].mxu0 %v59
    %v132 = vpop.f32.mrb[0].mxu0
    %v133 = vadd.f32 %v52, %v132
    %v134 = vpop.f32.mrb[0].mxu0
    %135 = vdwg.mxu0
    %v136 = vmul.f32 %v128, 5.656854
    %v137 = vmul.f32 %v133, 5.656854
    %vm138 = vcmask 261120
    %139 = vst.msk [vmem:[#allocation7] sm:$0xff] %vm138, %v136
    %140 = vst.msk [vmem:[#allocation7 + $0x8] sm:$0xff] %vm138, %v137
    // Predicated region
    $region22: #{tpu_custom_call.1} parent=1 // pred_check
      _
    $region23: #{tpu_custom_call.1} parent=1 // pred_check_branch
      %142 = sbr.rel (0) target = $region25
    $region24: #{tpu_custom_call.1} parent=1 // pred_region
      %s144 = ssub.s32 256, 256
      %145 = vsyncadd [#allocation4], %s144
      %s146 = sshll.u32 [#allocation7], 4
      %s147 = int_to_ptr.vmem [resolvable:$true] %s146
      %152 = dma.vmem_to_hbm [thread:$0]  %s147, 256, %s3, [#allocation4], 128, 128, 8
    $region25: #{tpu_custom_call.1} parent=1 // pred_fallthru
      _
    // Predicated region
    $region26: #{tpu_custom_call.1} parent=1 // pred_check
      _
    $region27: #{tpu_custom_call.1} parent=1 // pred_check_branch
      %154 = sbr.rel (0) target = $region29
    $region28: #{tpu_custom_call.1} parent=1 // pred_region
      %155 = dma.done [#allocation4], 256
    $region29: #{tpu_custom_call.1} parent=1 // pred_fallthru
      _
    %156 = vsyncpa [#allocation3], 1
    %157 = vsyncpa [#allocation6], 1
    %158 = vsyncpa [#allocation4], 1

</llo_original>
